<compile_context>
chip_gen: v6e
topology: v6e:2x2x1
jax: 0.10.0
libtpu: 0.0.40
codegen_flags: <defaults>
</compile_context>

<pallas_src>
import jax
import jax.numpy as jnp
from jax.experimental import pallas as pl
from jax.experimental.pallas import tpu as pltpu


OUT_PAD = 128  # lane-dense output width (num_outputs padded up to 128 lanes)


def mlp_kernel(x_ref, w0_ref, b0_ref, w1_ref, b1_ref, w2_ref, b2_ref, o_ref):
    # Three MXU matmuls (bf16 operands, f32 accumulation) with fused bias + ReLU.
    x = x_ref[...]                                                   # (TM, 131) bf16
    h0 = jnp.dot(x, w0_ref[...], preferred_element_type=jnp.float32) + b0_ref[...]
    h0 = jnp.maximum(h0, 0.0)
    h1 = jnp.dot(h0.astype(jnp.bfloat16), w1_ref[...],
                 preferred_element_type=jnp.float32) + b1_ref[...]
    h1 = jnp.maximum(h1, 0.0)
    out = jnp.dot(h1.astype(jnp.bfloat16), w2_ref[...],
                  preferred_element_type=jnp.float32) + b2_ref[...]  # (TM, 128) f32
    o_ref[...] = out.astype(o_ref.dtype)


def mlp_forward(x, params, *, tm=1024):
    """x: (B, num_inputs) float32. params: dict of (in, out)-layout weights/biases."""
    B, num_in = x.shape
    num_outputs = params["w2"].shape[1]

    # bf16 for the HBM-dominant operands; biases stay f32 for the f32 add path.
    xb = x.astype(jnp.bfloat16)
    w0 = params["w0"].astype(jnp.bfloat16)
    w1 = params["w1"].astype(jnp.bfloat16)
    b0 = params["b0"].astype(jnp.float32)
    b1 = params["b1"].astype(jnp.float32)
    # Pad the last layer to a lane-dense 128-wide output slab (zeros in the pad).
    w2 = jnp.zeros((params["w2"].shape[0], OUT_PAD), jnp.bfloat16)
    w2 = w2.at[:, :num_outputs].set(params["w2"].astype(jnp.bfloat16))
    b2 = jnp.zeros((1, OUT_PAD), jnp.float32)
    b2 = b2.at[:, :num_outputs].set(params["b2"].astype(jnp.float32))

    # Batch tile: multiple of 16 (bf16 sublane packing); large for pipeline efficiency.
    if B <= tm:
        TM = max(16, ((B + 15) // 16) * 16)
    else:
        TM = tm
    Bp = ((B + TM - 1) // TM) * TM
    if Bp != B:
        xb = jnp.pad(xb, ((0, Bp - B), (0, 0)))

    grid = (Bp // TM,)
    const2 = lambda a: pl.BlockSpec(a.shape, lambda i: (0, 0))  # VMEM-resident weights

    out = pl.pallas_call(
        mlp_kernel,
        out_shape=jax.ShapeDtypeStruct((Bp, OUT_PAD), jnp.float32),
        grid=grid,
        in_specs=[
            pl.BlockSpec((TM, num_in), lambda i: (i, 0)),  # x: tiled over batch
            const2(w0), const2(b0),
            const2(w1), const2(b1),
            const2(w2), const2(b2),
        ],
        out_specs=pl.BlockSpec((TM, OUT_PAD), lambda i: (i, 0)),
        compiler_params=pltpu.CompilerParams(
            dimension_semantics=("parallel",)),
    )(xb, w0, b0, w1, b1, w2, b2)

    return out[:B, :num_outputs]


def init_params(key, num_inputs=131, hidden=32, num_outputs=5):
    """Deterministic init mimicking nn.Linear default: U(-1/sqrt(fan_in), 1/sqrt(fan_in)).
    Weights stored transposed as (in, out)."""
    def linear(key, fan_in, fan_out):
        kw, kb = jax.random.split(key)
        bound = 1.0 / jnp.sqrt(jnp.float32(fan_in))
        w = jax.random.uniform(kw, (fan_in, fan_out), jnp.float32, -bound, bound)
        b = jax.random.uniform(kb, (1, fan_out), jnp.float32, -bound, bound)
        return w, b

    k0, k1, k2 = jax.random.split(key, 3)
    w0, b0 = linear(k0, num_inputs, hidden)
    w1, b1 = linear(k1, hidden, hidden)
    w2, b2 = linear(k2, hidden, num_outputs)
    return {"w0": w0, "b0": b0, "w1": w1, "b1": b1, "w2": w2, "b2": b2}


def ref_forward(x, params):
    """Pure-JAX reference replicating the kernel's bf16-operand / f32-accumulate math."""
    f32 = lambda a: a.astype(jnp.bfloat16).astype(jnp.float32)
    hi = jax.lax.Precision.HIGHEST
    h = jnp.maximum(jnp.dot(f32(x), f32(params["w0"]), precision=hi) + params["b0"], 0.0)
    h = jnp.maximum(jnp.dot(f32(h), f32(params["w1"]), precision=hi) + params["b1"], 0.0)
    return jnp.dot(f32(h), f32(params["w2"]), precision=hi) + params["b2"]


if __name__ == "__main__":
    key = jax.random.PRNGKey(0)
    k_params, k_x = jax.random.split(key)

    num_inputs, hidden, num_outputs = 131, 32, 5
    batch = 4

    params = init_params(k_params, num_inputs, hidden, num_outputs)
    x = jax.random.normal(k_x, (batch, num_inputs), dtype=jnp.float32)

    out = mlp_forward(x, params)
    jax.block_until_ready(out)

    ref = ref_forward(x, params)
    assert out.shape == (batch, num_outputs)
    assert jnp.allclose(out, ref, atol=1e-2, rtol=1e-2), (
        f"max abs diff = {jnp.max(jnp.abs(out - ref))}")

    print("KERNEL_OK")
</pallas_src>

<mosaic_0001>
module attributes {stable_mosaic.version = 11 : i64} {
  func.func @mlp_kernel(%arg0: i32, %arg1: memref<16x131xbf16, #tpu.memory_space<vmem>>, %arg2: memref<131x32xbf16, #tpu.memory_space<vmem>>, %arg3: memref<1x32xf32, #tpu.memory_space<vmem>>, %arg4: memref<32x32xbf16, #tpu.memory_space<vmem>>, %arg5: memref<1x32xf32, #tpu.memory_space<vmem>>, %arg6: memref<32x128xbf16, #tpu.memory_space<vmem>>, %arg7: memref<1x128xf32, #tpu.memory_space<vmem>>, %arg8: memref<16x128xf32, #tpu.memory_space<vmem>>) attributes {dimension_semantics = [#tpu.dimension_semantics<parallel>], iteration_bounds = array<i64: 1>, scalar_prefetch = 0 : i64, scratch_operands = 0 : i64, tpu.core_type = #tpu.core_type<tc>, window_params = [{transform_indices = @transform_0, window_bounds = array<i64: 16, 131>}, {pipeline_mode = #tpu.pipeline_mode<synchronous>, transform_indices = @transform_1, window_bounds = array<i64: 131, 32>}, {pipeline_mode = #tpu.pipeline_mode<synchronous>, transform_indices = @transform_2, window_bounds = array<i64: 1, 32>}, {pipeline_mode = #tpu.pipeline_mode<synchronous>, transform_indices = @transform_3, window_bounds = array<i64: 32, 32>}, {pipeline_mode = #tpu.pipeline_mode<synchronous>, transform_indices = @transform_4, window_bounds = array<i64: 1, 32>}, {pipeline_mode = #tpu.pipeline_mode<synchronous>, transform_indices = @transform_5, window_bounds = array<i64: 32, 128>}, {pipeline_mode = #tpu.pipeline_mode<synchronous>, transform_indices = @transform_6, window_bounds = array<i64: 1, 128>}, {transform_indices = @transform_7, window_bounds = array<i64: 16, 128>}]} {
    %c0 = arith.constant 0 : index
    %c0_0 = arith.constant 0 : index
    %0 = vector.load %arg1[%c0, %c0_0] : memref<16x131xbf16, #tpu.memory_space<vmem>>, vector<16x131xbf16>
    %c0_1 = arith.constant 0 : index
    %c0_2 = arith.constant 0 : index
    %1 = vector.load %arg2[%c0_1, %c0_2] : memref<131x32xbf16, #tpu.memory_space<vmem>>, vector<131x32xbf16>
    %cst = arith.constant dense<0.000000e+00> : vector<16x32xf32>
    %2 = tpu.matmul %0, %1, %cst {dimension_numbers = #tpu.dot_dimension_numbers<[1], [0], [0], [1], [0, 0, 1, 1], [], []>} : vector<16x131xbf16>, vector<131x32xbf16>, vector<16x32xf32> -> vector<16x32xf32>
    %c0_3 = arith.constant 0 : index
    %c0_4 = arith.constant 0 : index
    %3 = vector.load %arg3[%c0_3, %c0_4] : memref<1x32xf32, #tpu.memory_space<vmem>>, vector<1x32xf32>
    %4 = vector.broadcast %3 : vector<1x32xf32> to vector<16x32xf32>
    %5 = arith.addf %2, %4 : vector<16x32xf32>
    %cst_5 = arith.constant 0.000000e+00 : f32
    %6 = vector.broadcast %cst_5 : f32 to vector<16x32xf32>
    %7 = arith.maximumf %5, %6 : vector<16x32xf32>
    %8 = arith.truncf %7 : vector<16x32xf32> to vector<16x32xbf16>
    %c0_6 = arith.constant 0 : index
    %c0_7 = arith.constant 0 : index
    %9 = vector.load %arg4[%c0_6, %c0_7] : memref<32x32xbf16, #tpu.memory_space<vmem>>, vector<32x32xbf16>
    %cst_8 = arith.constant dense<0.000000e+00> : vector<16x32xf32>
    %10 = tpu.matmul %8, %9, %cst_8 {dimension_numbers = #tpu.dot_dimension_numbers<[1], [0], [0], [1], [0, 0, 1, 1], [], []>} : vector<16x32xbf16>, vector<32x32xbf16>, vector<16x32xf32> -> vector<16x32xf32>
    %c0_9 = arith.constant 0 : index
    %c0_10 = arith.constant 0 : index
    %11 = vector.load %arg5[%c0_9, %c0_10] : memref<1x32xf32, #tpu.memory_space<vmem>>, vector<1x32xf32>
    %12 = vector.broadcast %11 : vector<1x32xf32> to vector<16x32xf32>
    %13 = arith.addf %10, %12 : vector<16x32xf32>
    %cst_11 = arith.constant 0.000000e+00 : f32
    %14 = vector.broadcast %cst_11 : f32 to vector<16x32xf32>
    %15 = arith.maximumf %13, %14 : vector<16x32xf32>
    %16 = arith.truncf %15 : vector<16x32xf32> to vector<16x32xbf16>
    %c0_12 = arith.constant 0 : index
    %c0_13 = arith.constant 0 : index
    %17 = vector.load %arg6[%c0_12, %c0_13] : memref<32x128xbf16, #tpu.memory_space<vmem>>, vector<32x128xbf16>
    %cst_14 = arith.constant dense<0.000000e+00> : vector<16x128xf32>
    %18 = tpu.matmul %16, %17, %cst_14 {dimension_numbers = #tpu.dot_dimension_numbers<[1], [0], [0], [1], [0, 0, 1, 1], [], []>} : vector<16x32xbf16>, vector<32x128xbf16>, vector<16x128xf32> -> vector<16x128xf32>
    %c0_15 = arith.constant 0 : index
    %c0_16 = arith.constant 0 : index
    %19 = vector.load %arg7[%c0_15, %c0_16] : memref<1x128xf32, #tpu.memory_space<vmem>>, vector<1x128xf32>
    %20 = vector.broadcast %19 : vector<1x128xf32> to vector<16x128xf32>
    %21 = arith.addf %18, %20 : vector<16x128xf32>
    %c0_17 = arith.constant 0 : index
    %c0_18 = arith.constant 0 : index
    %22 = vector.load %arg8[%c0_17, %c0_18] : memref<16x128xf32, #tpu.memory_space<vmem>>, vector<16x128xf32>
    tpu.vector_store %arg8[%c0_17, %c0_18], %21 {strides = array<i32>} : memref<16x128xf32, #tpu.memory_space<vmem>>, vector<16x128xf32>,
    return
  }
  func.func @transform_0(%arg0: i32) -> (i32, i32) {
    %c0_i32 = arith.constant 0 : i32
    %c0_i32_0 = arith.constant 0 : i32
    return %arg0, %c0_i32 : i32, i32
  }
  func.func @transform_1(%arg0: i32) -> (i32, i32) {
    %c0_i32 = arith.constant 0 : i32
    %c0_i32_0 = arith.constant 0 : i32
    %c0_i32_1 = arith.constant 0 : i32
    return %c0_i32, %c0_i32_0 : i32, i32
  }
  func.func @transform_2(%arg0: i32) -> (i32, i32) {
    %c0_i32 = arith.constant 0 : i32
    %c0_i32_0 = arith.constant 0 : i32
    %c0_i32_1 = arith.constant 0 : i32
    return %c0_i32, %c0_i32_0 : i32, i32
  }
  func.func @transform_3(%arg0: i32) -> (i32, i32) {
    %c0_i32 = arith.constant 0 : i32
    %c0_i32_0 = arith.constant 0 : i32
    %c0_i32_1 = arith.constant 0 : i32
    return %c0_i32, %c0_i32_0 : i32, i32
  }
  func.func @transform_4(%arg0: i32) -> (i32, i32) {
    %c0_i32 = arith.constant 0 : i32
    %c0_i32_0 = arith.constant 0 : i32
    %c0_i32_1 = arith.constant 0 : i32
    return %c0_i32, %c0_i32_0 : i32, i32
  }
  func.func @transform_5(%arg0: i32) -> (i32, i32) {
    %c0_i32 = arith.constant 0 : i32
    %c0_i32_0 = arith.constant 0 : i32
    %c0_i32_1 = arith.constant 0 : i32
    return %c0_i32, %c0_i32_0 : i32, i32
  }
  func.func @transform_6(%arg0: i32) -> (i32, i32) {
    %c0_i32 = arith.constant 0 : i32
    %c0_i32_0 = arith.constant 0 : i32
    %c0_i32_1 = arith.constant 0 : i32
    return %c0_i32, %c0_i32_0 : i32, i32
  }
  func.func @transform_7(%arg0: i32) -> (i32, i32) {
    %c0_i32 = arith.constant 0 : i32
    %c0_i32_0 = arith.constant 0 : i32
    return %arg0, %c0_i32 : i32, i32
  }
}

</mosaic_0001>

<llo_original>
// kernel: tpu_custom_call.1
$region0: #{tpu_custom_call.1}
  #allocation0 [shape = 'u32[]', space=smem, size = 0x4, offset = 0x4, fixed_abs, tag = 'smem constant byte address 0x4 - core index']
  #allocation1 [shape = 'u32[144,128]{1,0:T(1,128)}', space=vmem, size = 0x12000, scoped, tag = 'internal scratch']
  %s0 = inlined_call_operand.vmem [shape: bf16[16,131], index: 0, kind: input, shape index: {}]
  %s1 = inlined_call_operand.vmem [shape: bf16[131,32], index: 1, kind: input, shape index: {}]
  %s2 = inlined_call_operand.vmem [shape: f32[1,32], index: 2, kind: input, shape index: {}]
  %s3 = inlined_call_operand.vmem [shape: bf16[32,32], index: 3, kind: input, shape index: {}]
  %s4 = inlined_call_operand.vmem [shape: f32[1,32], index: 4, kind: input, shape index: {}]
  %s5 = inlined_call_operand.vmem [shape: bf16[32,128], index: 5, kind: input, shape index: {}]
  %s6 = inlined_call_operand.vmem [shape: f32[1,128], index: 6, kind: input, shape index: {}]
  %s7 = inlined_call_operand.hbm [shape: f32[16,128], index: 7, kind: output, shape index: {}]
  %s8 = sld [smem:[#allocation0]]
  $region38: #{tpu_custom_call.1} parent=0
    _
  %s10 = ssub.s32 1, %s8
  %s11 = scalar_select 0, %s10, %s8
  $region1: #{tpu_custom_call.1} parent=0
    #allocation2 [shape = 'u8[8192]{0}', space=vmem, size = 0x2000, scoped, tag = 'output window, operand 0, single buffered']
    #allocation3 [shape = 's32[1]{0}', space=sflag, size = 0x4, scoped, tag = 'scoped memory for tpu_custom_call.1']
    %12 = vsyncpa [#allocation3], 0
    // Predicated region
    $region2: #{tpu_custom_call.1} parent=1 // pred_check
      _
    $region3: #{tpu_custom_call.1} parent=1 // pred_check_branch
      %14 = sbr.rel (0) target = $region5
    $region4: #{tpu_custom_call.1} parent=1 // pred_region
      _
    $region5: #{tpu_custom_call.1} parent=1 // pred_fallthru
      _
    // Predicated region
    $region6: #{tpu_custom_call.1} parent=1 // pred_check
      _
    $region7: #{tpu_custom_call.1} parent=1 // pred_check_branch
      %16 = sbr.rel (0) target = $region9
    $region8: #{tpu_custom_call.1} parent=1 // pred_region
      _
    $region9: #{tpu_custom_call.1} parent=1 // pred_fallthru
      _
    // Predicated region
    $region10: #{tpu_custom_call.1} parent=1 // pred_check
      _
    $region11: #{tpu_custom_call.1} parent=1 // pred_check_branch
      %18 = sbr.rel (0) target = $region13
    $region12: #{tpu_custom_call.1} parent=1 // pred_region
      _
    $region13: #{tpu_custom_call.1} parent=1 // pred_fallthru
      _
    // Predicated region
    $region14: #{tpu_custom_call.1} parent=1 // pred_check
      _
    $region15: #{tpu_custom_call.1} parent=1 // pred_check_branch
      %20 = sbr.rel (0) target = $region17
    $region16: #{tpu_custom_call.1} parent=1 // pred_region
      _
    $region17: #{tpu_custom_call.1} parent=1 // pred_fallthru
      _
    // Predicated region
    $region18: #{tpu_custom_call.1} parent=1 // pred_check
      _
    $region19: #{tpu_custom_call.1} parent=1 // pred_check_branch
      %22 = sbr.rel (0) target = $region21
    $region20: #{tpu_custom_call.1} parent=1 // pred_region
      _
    $region21: #{tpu_custom_call.1} parent=1 // pred_fallthru
      _
    // Predicated region
    $region22: #{tpu_custom_call.1} parent=1 // pred_check
      _
    $region23: #{tpu_custom_call.1} parent=1 // pred_check_branch
      %24 = sbr.rel (0) target = $region25
    $region24: #{tpu_custom_call.1} parent=1 // pred_region
      _
    $region25: #{tpu_custom_call.1} parent=1 // pred_fallthru
      _
    // Predicated region
    $region26: #{tpu_custom_call.1} parent=1 // pred_check
      _
    $region27: #{tpu_custom_call.1} parent=1 // pred_check_branch
      %26 = sbr.rel (0) target = $region29
    $region28: #{tpu_custom_call.1} parent=1 // pred_region
      _
    $region29: #{tpu_custom_call.1} parent=1 // pred_fallthru
      _
    %v28 = vld [vmem:[%s0] sm:$0xff]
    %v29 = vld [vmem:[%s0 + $0x8] sm:$0xff]
    %v30 = vld [vmem:[%s1] sm:$0xf]
    %v31 = vld [vmem:[%s1 + $0x4] sm:$0xf]
    %v32 = vld [vmem:[%s1 + $0x8] sm:$0xf]
    %v33 = vld [vmem:[%s1 + $0xc] sm:$0xf]
    %v34 = vld [vmem:[%s1 + $0x10] sm:$0xf]
    %v35 = vld [vmem:[%s1 + $0x14] sm:$0xf]
    %v36 = vld [vmem:[%s1 + $0x18] sm:$0xf]
    %v37 = vld [vmem:[%s1 + $0x1c] sm:$0xf]
    %v38 = vld [vmem:[%s1 + $0x20] sm:$0xf]
    %v39 = vld [vmem:[%s1 + $0x24] sm:$0xf]
    %v40 = vld [vmem:[%s1 + $0x28] sm:$0xf]
    %v41 = vld [vmem:[%s1 + $0x2c] sm:$0xf]
    %v42 = vld [vmem:[%s1 + $0x30] sm:$0xf]
    %v43 = vld [vmem:[%s1 + $0x34] sm:$0xf]
    %v44 = vld [vmem:[%s1 + $0x38] sm:$0xf]
    %v45 = vld [vmem:[%s1 + $0x3c] sm:$0xf]
    %v46 = vld [vmem:[%s1 + $0x40] sm:$0x3]
    %v47 = vld [vmem:[%s2] sm:$0x1]
    %v49 = vlaneseq
    %v50 = vshrl.u32 %v49, 7
    %v51 = vsub.s32 0, %v50
    %v52 = vrot.slane %v47, %v51
    %v56 = vunpack.c.l.b16 %v28
    %v57 = vunpack.c.h.b16 %v28
    %v58 = vunpack.c.l.b16 %v29
    %v59 = vunpack.c.h.b16 %v29
    %v60 = vpack.c.b16 %v58, %v56
    %v61 = vpack.c.b16 %v59, %v57
    %v80 = vunpack.c.l.b16 %v30
    %v81 = vunpack.c.l.b16 %v31
    %v82 = vunpack.c.l.b16 %v32
    %v83 = vunpack.c.l.b16 %v33
    %v84 = vunpack.c.l.b16 %v34
    %v85 = vunpack.c.l.b16 %v35
    %v86 = vunpack.c.l.b16 %v36
    %v87 = vunpack.c.l.b16 %v37
    %v88 = vunpack.c.l.b16 %v38
    %v89 = vunpack.c.l.b16 %v39
    %v90 = vunpack.c.l.b16 %v40
    %v91 = vunpack.c.l.b16 %v41
    %v92 = vunpack.c.l.b16 %v42
    %v93 = vunpack.c.l.b16 %v43
    %v94 = vunpack.c.l.b16 %v44
    %v95 = vunpack.c.l.b16 %v45
    %v96 = vunpack.c.l.b16 %v46
    %v97 = vpack.c.b16 %v81, %v80
    %v98 = vpack.c.b16 %v83, %v82
    %v99 = vpack.c.b16 %v85, %v84
    %v100 = vpack.c.b16 %v87, %v86
    %v101 = vpack.c.b16 %v89, %v88
    %v102 = vpack.c.b16 %v91, %v90
    %v103 = vpack.c.b16 %v93, %v92
    %v104 = vpack.c.b16 %v95, %v94
    %v105 = vpack.c.b16 %v96, %v96
    %vm114 = vcmask 23552
    %v116 = vsel %vm114, %v61, 0
    %vm118 = vcmask 1040384
    %vm119 = vcmask 1041408
    %v120 = vsel %vm118, 4294967295, 65535
    %v121 = vsel %vm119, %v120, 0
    %v123 = vand.u32 %v105, %v121
    %125 = vmatprep.subr.bf16.mxu0 0
    %126 = vmatpush1.bf16.msra.mxu0 %v104
    %127 = vmatprep.subr.bf16.mxu0 0
    %128 = vmatpush1.bf16.msra.mxu0 %v103
    %129 = vmatprep.subr.bf16.mxu0 0
    %130 = vmatpush1.bf16.msra.mxu0 %v102
    %131 = vmatprep.subr.bf16.mxu0 0
    %132 = vmatpush1.bf16.msra.mxu0 %v101
    %133 = vmatprep.subr.bf16.mxu0 0
    %134 = vmatpush1.bf16.msra.mxu0 %v100
    %135 = vmatprep.subr.bf16.mxu0 0
    %136 = vmatpush1.bf16.msra.mxu0 %v99
    %137 = vmatprep.subr.bf16.mxu0 0
    %138 = vmatpush1.bf16.msra.mxu0 %v98
    %139 = vmatprep.subr.bf16.mxu0 0
    %140 = vmatpush1.bf16.msra.mxu0 %v97
    %141 = vmatprep.subr.bf16.mxu0 0
    %142 = vmatpush2.bf16.msra.mxu0 0
    %143 = vmatprep.subr.bf16.mxu0 0
    %144 = vmatpush2.bf16.msra.mxu0 0
    %145 = vmatprep.subr.bf16.mxu0 0
    %146 = vmatpush2.bf16.msra.mxu0 0
    %147 = vmatprep.subr.bf16.mxu0 0
    %148 = vmatpush2.bf16.msra.mxu0 0
    %149 = vmatprep.subr.bf16.mxu0 0
    %150 = vmatpush2.bf16.msra.mxu0 0
    %151 = vmatprep.subr.bf16.mxu0 0
    %152 = vmatpush2.bf16.msra.mxu0 0
    %153 = vmatprep.subr.bf16.mxu0 0
    %154 = vmatpush2.bf16.msra.mxu0 0
    %155 = vmatprep.subr.bf16.mxu0 0
    %156 = vmatpush2.bf16.msra.mxu0 %v123
    %157 = vmatprep.mubr.bf16.mxu0 %v116
    %158 = vmatmul.mubr.bf16.gmra.mxu0 %v60
    %v159 = vpop.f32.mrf.mxu0
    %v160 = vadd.f32 %v52, %v159
    %v161 = vpop.f32.mrf.mxu0
    %v162 = vpop.f32.mrf.mxu0
    %v163 = vadd.f32 %v52, %v162
    %v164 = vpop.f32.mrf.mxu0
    %165 = vdwg.mxu0
    %v166 = vmax.f32 %v160, 0.0
    %v167 = vmax.f32 %v163, 0.0
    %v168 = vpack.c.bf16 %v167, %v166
    %v169 = vld [vmem:[%s3] sm:$0xf]
    %v170 = vld [vmem:[%s3 + $0x4] sm:$0xf]
    %v171 = vld [vmem:[%s3 + $0x8] sm:$0xf]
    %v172 = vld [vmem:[%s3 + $0xc] sm:$0xf]
    %v173 = vld [vmem:[%s4] sm:$0x1]
    %v175 = vlaneseq
    %v176 = vshrl.u32 %v175, 7
    %v177 = vsub.s32 0, %v176
    %v178 = vrot.slane %v173, %v177
    %v184 = vunpack.c.l.b16 %v169
    %v185 = vunpack.c.l.b16 %v170
    %v186 = vunpack.c.l.b16 %v171
    %v187 = vunpack.c.l.b16 %v172
    %v188 = vpack.c.b16 %v185, %v184
    %v189 = vpack.c.b16 %v187, %v186
    %vm192 = vcmask 261120
    %v194 = vsel %vm192, %v168, 0
    %196 = vmatprep.subr.bf16.mxu0 0
    %197 = vmatpush1.bf16.msra.mxu0 0
    %198 = vmatprep.subr.bf16.mxu0 0
    %199 = vmatpush1.bf16.msra.mxu0 0
    %200 = vmatprep.subr.bf16.mxu0 0
    %201 = vmatpush1.bf16.msra.mxu0 0
    %202 = vmatprep.subr.bf16.mxu0 0
    %203 = vmatpush1.bf16.msra.mxu0 0
    %204 = vmatprep.subr.bf16.mxu0 0
    %205 = vmatpush1.bf16.msra.mxu0 0
    %206 = vmatprep.subr.bf16.mxu0 0
    %207 = vmatpush1.bf16.msra.mxu0 0
    %208 = vmatprep.subr.bf16.mxu0 0
    %209 = vmatpush1.bf16.msra.mxu0 %v189
    %210 = vmatprep.subr.bf16.mxu0 0
    %211 = vmatpush1.bf16.msra.mxu0 %v188
    %212 = vmatprep.subr.bf16.mxu0 0
    %213 = vmatpush2.bf16.msra.mxu0 0
    %214 = vmatprep.subr.bf16.mxu0 0
    %215 = vmatpush2.bf16.msra.mxu0 0
    %216 = vmatprep.subr.bf16.mxu0 0
    %217 = vmatpush2.bf16.msra.mxu0 0
    %218 = vmatprep.subr.bf16.mxu0 0
    %219 = vmatpush2.bf16.msra.mxu0 0
    %220 = vmatprep.subr.bf16.mxu0 0
    %221 = vmatpush2.bf16.msra.mxu0 0
    %222 = vmatprep.subr.bf16.mxu0 0
    %223 = vmatpush2.bf16.msra.mxu0 0
    %224 = vmatprep.subr.bf16.mxu0 0
    %225 = vmatpush2.bf16.msra.mxu0 0
    %226 = vmatprep.subr.bf16.mxu0 0
    %227 = vmatpush2.bf16.msra.mxu0 0
    %228 = vmatprep.mubr.bf16.mxu0 0
    %229 = vmatmul.mubr.bf16.gmra.mxu0 %v194
    %v230 = vpop.f32.mrf.mxu0
    %v231 = vadd.f32 %v178, %v230
    %v232 = vpop.f32.mrf.mxu0
    %v233 = vpop.f32.mrf.mxu0
    %v234 = vadd.f32 %v178, %v233
    %v235 = vpop.f32.mrf.mxu0
    %236 = vdwg.mxu0
    %v237 = vmax.f32 %v231, 0.0
    %v238 = vmax.f32 %v234, 0.0
    %v239 = vpack.c.bf16 %v238, %v237
    %v240 = vld [vmem:[%s5] sm:$0xf]
    %v241 = vld [vmem:[%s5 + $0x4] sm:$0xf]
    %v242 = vld [vmem:[%s5 + $0x8] sm:$0xf]
    %v243 = vld [vmem:[%s5 + $0xc] sm:$0xf]
    %v244 = vld [vmem:[%s6] sm:$0x1]
    %v246 = vlaneseq
    %v247 = vshrl.u32 %v246, 7
    %v248 = vsub.s32 0, %v247
    %v249 = vrot.slane %v244, %v248
    %v255 = vunpack.c.l.b16 %v240
    %v256 = vunpack.c.l.b16 %v241
    %v257 = vunpack.c.l.b16 %v242
    %v258 = vunpack.c.l.b16 %v243
    %v259 = vpack.c.b16 %v256, %v255
    %v260 = vpack.c.b16 %v258, %v257
    %v264 = vsel %vm192, %v239, 0
    %266 = vmatprep.subr.bf16.mxu0 0
    %267 = vmatpush1.bf16.msra.mxu0 0
    %268 = vmatprep.subr.bf16.mxu0 0
    %269 = vmatpush1.bf16.msra.mxu0 0
    %270 = vmatprep.subr.bf16.mxu0 0
    %271 = vmatpush1.bf16.msra.mxu0 0
    %272 = vmatprep.subr.bf16.mxu0 0
    %273 = vmatpush1.bf16.msra.mxu0 0
    %274 = vmatprep.subr.bf16.mxu0 0
    %275 = vmatpush1.bf16.msra.mxu0 0
    %276 = vmatprep.subr.bf16.mxu0 0
    %277 = vmatpush1.bf16.msra.mxu0 0
    %278 = vmatprep.subr.bf16.mxu0 0
    %279 = vmatpush1.bf16.msra.mxu0 %v260
    %280 = vmatprep.subr.bf16.mxu0 0
    %281 = vmatpush1.bf16.msra.mxu0 %v259
    %282 = vmatprep.subr.bf16.mxu0 0
    %283 = vmatpush2.bf16.msra.mxu0 0
    %284 = vmatprep.subr.bf16.mxu0 0
    %285 = vmatpush2.bf16.msra.mxu0 0
    %286 = vmatprep.subr.bf16.mxu0 0
    %287 = vmatpush2.bf16.msra.mxu0 0
    %288 = vmatprep.subr.bf16.mxu0 0
    %289 = vmatpush2.bf16.msra.mxu0 0
    %290 = vmatprep.subr.bf16.mxu0 0
    %291 = vmatpush2.bf16.msra.mxu0 0
    %292 = vmatprep.subr.bf16.mxu0 0
    %293 = vmatpush2.bf16.msra.mxu0 0
    %294 = vmatprep.subr.bf16.mxu0 0
    %295 = vmatpush2.bf16.msra.mxu0 0
    %296 = vmatprep.subr.bf16.mxu0 0
    %297 = vmatpush2.bf16.msra.mxu0 0
    %298 = vmatprep.mubr.bf16.mxu0 0
    %299 = vmatmul.mubr.bf16.gmra.mxu0 %v264
    %v300 = vpop.f32.mrf.mxu0
    %v301 = vadd.f32 %v249, %v300
    %v302 = vpop.f32.mrf.mxu0
    %v303 = vpop.f32.mrf.mxu0
    %v304 = vadd.f32 %v249, %v303
    %v305 = vpop.f32.mrf.mxu0
    %306 = vdwg.mxu0
    %307 = vst [vmem:[#allocation2] sm:$0xff] %v301
    %308 = vst [vmem:[#allocation2 + $0x8] sm:$0xff] %v304
    // Predicated region
    $region30: #{tpu_custom_call.1} parent=1 // pred_check
      _
    $region31: #{tpu_custom_call.1} parent=1 // pred_check_branch
      %310 = sbr.rel (0) target = $region33
    $region32: #{tpu_custom_call.1} parent=1 // pred_region
      %s312 = ssub.s32 256, 256
      %313 = vsyncadd [#allocation3], %s312
      %s314 = sshll.u32 [#allocation2], 4
      %s315 = int_to_ptr.vmem [resolvable:$true] %s314
      %320 = dma.vmem_to_hbm [thread:$0]  %s315, 256, %s7, [#allocation3], 128, 128, 8
    $region33: #{tpu_custom_call.1} parent=1 // pred_fallthru
      _
    // Predicated region
    $region34: #{tpu_custom_call.1} parent=1 // pred_check
      _
    $region35: #{tpu_custom_call.1} parent=1 // pred_check_branch
      %322 = sbr.rel (0) target = $region37
    $region36: #{tpu_custom_call.1} parent=1 // pred_region
      %323 = dma.done [#allocation3], 256
    $region37: #{tpu_custom_call.1} parent=1 // pred_fallthru
      _
    %324 = vsyncpa [#allocation3], 1

</llo_original>
